<compile_context>
chip_gen: v5e
topology: v5e:2x2
jax: 0.10.0
libtpu: 0.0.40
codegen_flags: <defaults>
</compile_context>

<pallas_src>
import functools

import jax
import jax.numpy as jnp
from jax.experimental import pallas as pl
from jax.experimental.pallas import tpu as pltpu


def _round_up(x, m):
    return ((x + m - 1) // m) * m


# --------------------------------------------------------------------------
# Fused kernel: [layer-0 experts + all gate logits in ONE wide MXU dot]
#  -> expert MLP hidden layers -> per-expert mtmd_matrix projection
#  -> per-task softmax gate mixing -> final (tile_b, n_task) output.
# --------------------------------------------------------------------------
def _mmoe_fused_kernel(*refs, n_exp, n_layer, n_task, hidden_pad, compute_dtype):
    if n_layer > 1:
        (x_ref, wcat_ref, bcat_ref, ewh_ref, ebh_ref, owt_ref, ob_ref, out_ref) = refs
    else:
        (x_ref, wcat_ref, bcat_ref, owt_ref, ob_ref, out_ref) = refs
        ewh_ref = ebh_ref = None

    x = x_ref[...]                                   # (tile_b, c_in), compute_dtype

    # One wide dot covers all n_exp layer-0 expert matmuls AND all n_task gate
    # matmuls (K = c_in is tiny; merging fills the MXU N dim and pays push/pop once).
    # Layer-0 / gate biases are pre-concatenated into bcat.
    wide = jnp.dot(x, wcat_ref[...], preferred_element_type=jnp.float32)
    wide = wide + bcat_ref[...]                      # f32 epilogue

    # ---- Experts: hidden layers + fused mtmd_matrix head projection ----
    owt = owt_ref[...]                               # (hidden_pad, n_task) f32
    projs = []
    for e in range(n_exp):
        h = wide[:, e * hidden_pad:(e + 1) * hidden_pad]       # (tile_b, Hp) f32
        if n_layer > 1:
            h = jnp.maximum(h, 0.0)                  # ReLU on all but last layer
            for l in range(n_layer - 1):
                h = jnp.dot(h.astype(compute_dtype), ewh_ref[e, l],
                            preferred_element_type=jnp.float32)
                h = h + ebh_ref[e, l]
                if l < n_layer - 2:
                    h = jnp.maximum(h, 0.0)
        # Fused output head: project to the n_task outputs now so the gate mix
        # below touches (tile_b, n_task) instead of (tile_b, hidden_pad).
        projs.append(jnp.dot(h, owt, preferred_element_type=jnp.float32))

    # ---- Gates: per-task softmax over experts, mix the projected experts ----
    gate_off = n_exp * hidden_pad
    task_iota = jax.lax.broadcasted_iota(jnp.int32, (1, n_task), 1)
    acc = jnp.zeros((x.shape[0], n_task), jnp.float32)
    for g in range(n_task):
        logits = wide[:, gate_off + g * n_exp: gate_off + (g + 1) * n_exp]  # bias included
        logits = logits - jnp.max(logits, axis=-1, keepdims=True)
        p = jnp.exp(logits)
        # EUP reciprocal (separate VLIW slot) instead of a VALU divide.
        p = p * pl.reciprocal(jnp.sum(p, axis=-1, keepdims=True), approx=True)
        mixed = p[:, 0:1] * projs[0]
        for e in range(1, n_exp):
            mixed = mixed + p[:, e:e + 1] * projs[e]           # (tile_b, n_task)
        acc = acc + jnp.where(task_iota == g, mixed, 0.0)      # keep only column g
    out_ref[...] = (acc + ob_ref[...]).astype(out_ref.dtype)


# --------------------------------------------------------------------------
# Parameter init (mirrors nn.Linear / kaiming_uniform(a=sqrt(5)) scales)
# --------------------------------------------------------------------------
def init_mmoe_params(key, c_in, hidden, n_exp, n_exp_layer, n_task):
    def linear(k, d_in, d_out):
        kw, kb = jax.random.split(k)
        bound = 1.0 / float(d_in) ** 0.5
        w = jax.random.uniform(kw, (d_out, d_in), jnp.float32, -bound, bound)
        b = jax.random.uniform(kb, (d_out,), jnp.float32, -bound, bound)
        return w, b

    experts = []
    for _ in range(n_exp):
        layers = []
        for l in range(n_exp_layer):
            d_in = c_in if l == 0 else hidden
            key, k = jax.random.split(key)
            layers.append(linear(k, d_in, hidden))   # w: (hidden, d_in) torch layout
        experts.append(layers)

    gates = []
    for _ in range(n_task):
        key, k = jax.random.split(key)
        gates.append(linear(k, c_in, n_exp))         # w: (n_exp, c_in)

    key, k = jax.random.split(key)
    ow, ob = linear(k, hidden, n_task)               # mlp_w: (n_task, hidden)
    return {"experts": experts, "gates": gates, "output": (ow, ob)}


# --------------------------------------------------------------------------
# One-time parameter prep: transpose, merge layer-0+gates into one wide matrix,
# stack hidden-layer weights across experts, zero-pad hidden to the lane width.
# --------------------------------------------------------------------------
def prepare_mmoe_params(params, *, compute_dtype=jnp.float32, lane=128):
    experts = params["experts"]
    gates = params["gates"]
    n_exp = len(experts)
    n_task = len(gates)
    n_layer = len(experts[0])
    hidden, c_in = experts[0][0][0].shape
    hidden_pad = _round_up(hidden, lane)
    gate_cols = n_task * n_exp
    gate_pad = _round_up(gate_cols, lane)

    def pad_cols(a, cols):
        return jnp.pad(a, ((0, 0), (0, cols - a.shape[1])))

    def pad1(a, n):
        return jnp.pad(a, (0, n - a.shape[0]))

    def pad2(a, rows, cols):
        return jnp.pad(a, ((0, rows - a.shape[0]), (0, cols - a.shape[1])))

    # Layer-0 expert weights/biases and all gate weights/biases merged into one
    # wide matrix / bias row so the kernel does a single MXU dot for this stage.
    w0_blocks = [pad_cols(layers[0][0].T, hidden_pad) for layers in experts]       # (c_in, Hp)
    b0_blocks = [pad1(layers[0][1], hidden_pad) for layers in experts]              # (Hp,)
    gw_block = pad_cols(jnp.concatenate([w.T for (w, _) in gates], axis=1), gate_pad)   # (c_in, Gp)
    gb_block = pad1(jnp.concatenate([b for (_, b) in gates], axis=0), gate_pad)         # (Gp,)
    wcat = jnp.concatenate(w0_blocks + [gw_block], axis=1).astype(compute_dtype)        # (c_in, E*Hp+Gp)
    bcat = jnp.concatenate(b0_blocks + [gb_block], axis=0)[None, :].astype(jnp.float32)  # (1, E*Hp+Gp)

    if n_layer > 1:
        ewh = jnp.stack([jnp.stack([pad2(layers[l][0].T, hidden_pad, hidden_pad)
                                    for l in range(1, n_layer)]) for layers in experts]
                        ).astype(compute_dtype)                   # (E, L-1, Hp, Hp)
        ebh = jnp.stack([jnp.stack([pad1(layers[l][1], hidden_pad)[None, :]
                                    for l in range(1, n_layer)]) for layers in experts]
                        ).astype(jnp.float32)                     # (E, L-1, 1, Hp)
    else:
        ewh = ebh = None

    ow_, ob_ = params["output"]                                   # (n_task, hidden), (n_task,)
    # Output head kept f32 (tiny N = n_task) for better bf16-path parity.
    owt = jnp.pad(ow_.T, ((0, hidden_pad - hidden), (0, 0))).astype(jnp.float32)  # (Hp, n_task)
    ob = ob_[None, :].astype(jnp.float32)                                          # (1, n_task)

    return dict(wcat=wcat, bcat=bcat, ewh=ewh, ebh=ebh, owt=owt, ob=ob,
                n_exp=n_exp, n_task=n_task, n_layer=n_layer, c_in=c_in,
                hidden=hidden, hidden_pad=hidden_pad, compute_dtype=compute_dtype)


# --------------------------------------------------------------------------
# Forward pass
# --------------------------------------------------------------------------
def mmoe_decoder_forward(prepped, x, *, pred_len, c_out, tile_n=512,
                         vmem_budget_bytes=48 * 1024 * 1024):
    compute_dtype = prepped["compute_dtype"]
    n_exp = prepped["n_exp"]
    n_task = prepped["n_task"]
    n_layer = prepped["n_layer"]
    hidden_pad = prepped["hidden_pad"]

    B, S, c_in = x.shape

    # Only the last timestep reaches the mtmd_matrix head, and MLP experts /
    # softmax gates are pointwise over time -> compute experts/gates for B rows,
    # not B*S.  (OutputBlock dropout is identity in eval mode.)
    xl = x[:, S - 1, :].astype(compute_dtype)                    # (B, c_in)

    # bf16 packs 2 rows per sublane -> 16-row tile granularity; f32 -> 8.
    row_align = 16 if jnp.dtype(compute_dtype) == jnp.dtype(jnp.bfloat16) else 8

    weight_arrays = [prepped["wcat"], prepped["bcat"], prepped["owt"], prepped["ob"]]
    if n_layer > 1:
        weight_arrays += [prepped["ewh"], prepped["ebh"]]
    weight_bytes = sum(int(a.nbytes) for a in weight_arrays)
    wide_cols = prepped["wcat"].shape[1]
    dt_bytes = jnp.dtype(compute_dtype).itemsize

    def vmem_estimate(tile):
        est = 2 * weight_bytes                       # resident weights (Pallas double-buffers)
        est += 2 * tile * c_in * dt_bytes            # x tile, double-buffered
        est += 2 * tile * n_task * 4                 # output tile, double-buffered
        est += tile * wide_cols * 4                  # fused layer-0 + gate-logit intermediate
        est += 4 * tile * hidden_pad * 4             # per-expert hidden working set headroom
        return est

    # Largest row tile that fits the explicit VMEM budget (v7x: 64 MiB/TC,
    # 32 MiB default scoped limit on all generations).
    tile_b = min(_round_up(tile_n, row_align), _round_up(B, row_align))
    while tile_b > row_align and vmem_estimate(tile_b) > vmem_budget_bytes:
        tile_b = max(row_align, (tile_b // 2) // row_align * row_align)
    # v7x has 2 TensorCores: prefer >=2 steps on the "parallel" row axis when B allows.
    if _round_up(B, row_align) // tile_b < 2 and tile_b >= 2 * row_align:
        tile_b = (tile_b // 2) // row_align * row_align

    b_pad = _round_up(B, tile_b)
    if b_pad != B:
        xl = jnp.pad(xl, ((0, b_pad - B), (0, 0)))

    kernel = functools.partial(_mmoe_fused_kernel, n_exp=n_exp, n_layer=n_layer,
                               n_task=n_task, hidden_pad=hidden_pad,
                               compute_dtype=compute_dtype)

    in_specs = [
        pl.BlockSpec((tile_b, c_in), lambda i: (i, 0)),                  # x row tile
        pl.BlockSpec(prepped["wcat"].shape, lambda i: (0, 0)),           # resident weights
        pl.BlockSpec(prepped["bcat"].shape, lambda i: (0, 0)),
    ]
    args = [xl, prepped["wcat"], prepped["bcat"]]
    if n_layer > 1:
        in_specs += [
            pl.BlockSpec(prepped["ewh"].shape, lambda i: (0, 0, 0, 0)),
            pl.BlockSpec(prepped["ebh"].shape, lambda i: (0, 0, 0, 0)),
        ]
        args += [prepped["ewh"], prepped["ebh"]]
    in_specs += [
        pl.BlockSpec(prepped["owt"].shape, lambda i: (0, 0)),
        pl.BlockSpec(prepped["ob"].shape, lambda i: (0, 0)),
    ]
    args += [prepped["owt"], prepped["ob"]]

    vmem_limit = int(min(100 * 2 ** 20, max(32 * 2 ** 20, 2 * vmem_estimate(tile_b))))

    out = pl.pallas_call(
        kernel,
        out_shape=jax.ShapeDtypeStruct((b_pad, n_task), jnp.float32),
        grid=(b_pad // tile_b,),
        in_specs=in_specs,
        out_specs=pl.BlockSpec((tile_b, n_task), lambda i: (i, 0)),
        compiler_params=pltpu.CompilerParams(
            dimension_semantics=("parallel",),
            vmem_limit_bytes=vmem_limit),
    )(*args)

    out = out[:B].reshape(-1, pred_len, c_out)                   # (B, pred_len, c_out)
    return out.astype(x.dtype)


# --------------------------------------------------------------------------
# Pure-JAX reference (mirrors the PyTorch forward, full sequence)
# --------------------------------------------------------------------------
def mmoe_decoder_ref(params, x, pred_len, c_out):
    expert_outs = []
    for layers in params["experts"]:
        h = x
        L = len(layers)
        for l, (w, b) in enumerate(layers):
            h = h @ w.T + b
            if l < L - 1:
                h = jnp.maximum(h, 0.0)
        expert_outs.append(h)
    et = jnp.stack(expert_outs, axis=0)                          # (E, B, S, H)

    gate_outs = []
    for (gw, gb) in params["gates"]:
        p = jax.nn.softmax(x @ gw.T + gb, axis=-1)               # (B, S, E)
        gate_outs.append(jnp.einsum('bse,ebsd->bsd', p, et))
    go = jnp.stack(gate_outs, axis=0)                            # (T, B, S, H)

    last = go[:, :, -1, :]                                       # (T, B, H)
    ow, ob = params["output"]
    out = jnp.einsum('od,obd->bo', ow, last) + ob                # (B, T)
    return out.reshape(-1, pred_len, c_out)


if __name__ == "__main__":
    key = jax.random.PRNGKey(0)
    k_x, k_p = jax.random.split(key)

    # Small MMoE config: B=2, seq=8, c_in=8, hidden=32, 4 experts (2-layer MLPs),
    # n_task = pred_len * c_out = 4 softmax gates, mtmd_matrix output head.
    B, S, c_in = 2, 8, 8
    hidden, n_exp, n_exp_layer = 32, 4, 2
    pred_len, c_out = 4, 1
    n_task = pred_len * c_out

    x = jax.random.normal(k_x, (B, S, c_in), dtype=jnp.float32)
    params = init_mmoe_params(k_p, c_in, hidden, n_exp, n_exp_layer, n_task)
    ref = mmoe_decoder_ref(params, x, pred_len, c_out)

    # f32 path (recommended on v5e: no bf16 VPU there).
    # Tolerance 5e-3 covers the approx (EUP) softmax reciprocal + fused-head reassociation.
    prepped = prepare_mmoe_params(params, compute_dtype=jnp.float32)
    out = jax.block_until_ready(
        mmoe_decoder_forward(prepped, x, pred_len=pred_len, c_out=c_out))
    assert out.shape == (B, pred_len, c_out)
    assert jnp.allclose(out, ref, atol=5e-3, rtol=5e-3), float(jnp.max(jnp.abs(out - ref)))

    # bf16 matmul inputs + f32 accumulation path (v6e/v7x MXU-friendly);
    # output-head projection stays f32 for parity.
    prepped_bf16 = prepare_mmoe_params(params, compute_dtype=jnp.bfloat16)
    out_bf16 = jax.block_until_ready(
        mmoe_decoder_forward(prepped_bf16, x, pred_len=pred_len, c_out=c_out))
    assert out_bf16.shape == (B, pred_len, c_out)
    assert jnp.allclose(out_bf16, ref, atol=5e-2, rtol=5e-2), \
        float(jnp.max(jnp.abs(out_bf16 - ref)))

    print("KERNEL_OK")
</pallas_src>

<mosaic_0001>
module attributes {stable_mosaic.version = 11 : i64} {
  func.func @_mmoe_fused_kernel(%arg0: i32, %arg1: memref<8x8xf32, #tpu.memory_space<vmem>>, %arg2: memref<8x640xf32, #tpu.memory_space<vmem>>, %arg3: memref<1x640xf32, #tpu.memory_space<vmem>>, %arg4: memref<4x1x128x128xf32, #tpu.memory_space<vmem>>, %arg5: memref<4x1x1x128xf32, #tpu.memory_space<vmem>>, %arg6: memref<128x4xf32, #tpu.memory_space<vmem>>, %arg7: memref<1x4xf32, #tpu.memory_space<vmem>>, %arg8: memref<8x4xf32, #tpu.memory_space<vmem>>) attributes {dimension_semantics = [#tpu.dimension_semantics<parallel>], iteration_bounds = array<i64: 1>, scalar_prefetch = 0 : i64, scratch_operands = 0 : i64, tpu.core_type = #tpu.core_type<tc>, window_params = [{transform_indices = @transform_0, window_bounds = array<i64: 8, 8>}, {pipeline_mode = #tpu.pipeline_mode<synchronous>, transform_indices = @transform_1, window_bounds = array<i64: 8, 640>}, {pipeline_mode = #tpu.pipeline_mode<synchronous>, transform_indices = @transform_2, window_bounds = array<i64: 1, 640>}, {pipeline_mode = #tpu.pipeline_mode<synchronous>, transform_indices = @transform_3, window_bounds = array<i64: 4, 1, 128, 128>}, {pipeline_mode = #tpu.pipeline_mode<synchronous>, transform_indices = @transform_4, window_bounds = array<i64: 4, 1, 1, 128>}, {pipeline_mode = #tpu.pipeline_mode<synchronous>, transform_indices = @transform_5, window_bounds = array<i64: 128, 4>}, {pipeline_mode = #tpu.pipeline_mode<synchronous>, transform_indices = @transform_6, window_bounds = array<i64: 1, 4>}, {transform_indices = @transform_7, window_bounds = array<i64: 8, 4>}]} {
    %c0 = arith.constant 0 : index
    %c0_0 = arith.constant 0 : index
    %0 = vector.load %arg1[%c0, %c0_0] : memref<8x8xf32, #tpu.memory_space<vmem>>, vector<8x8xf32>
    %c0_1 = arith.constant 0 : index
    %c0_2 = arith.constant 0 : index
    %1 = vector.load %arg2[%c0_1, %c0_2] : memref<8x640xf32, #tpu.memory_space<vmem>>, vector<8x640xf32>
    %cst = arith.constant dense<0.000000e+00> : vector<8x640xf32>
    %2 = tpu.matmul %0, %1, %cst {dimension_numbers = #tpu.dot_dimension_numbers<[1], [0], [0], [1], [0, 0, 1, 1], [], []>} : vector<8x8xf32>, vector<8x640xf32>, vector<8x640xf32> -> vector<8x640xf32>
    %c0_3 = arith.constant 0 : index
    %c0_4 = arith.constant 0 : index
    %3 = vector.load %arg3[%c0_3, %c0_4] : memref<1x640xf32, #tpu.memory_space<vmem>>, vector<1x640xf32>
    %4 = vector.broadcast %3 : vector<1x640xf32> to vector<8x640xf32>
    %5 = arith.addf %2, %4 : vector<8x640xf32>
    %c0_5 = arith.constant 0 : index
    %c0_6 = arith.constant 0 : index
    %6 = vector.load %arg6[%c0_5, %c0_6] : memref<128x4xf32, #tpu.memory_space<vmem>>, vector<128x4xf32>
    %7 = vector.extract_strided_slice %5 {offsets = [0, 0], sizes = [8, 128], strides = [1, 1]} : vector<8x640xf32> to vector<8x128xf32>
    %cst_7 = arith.constant 0.000000e+00 : f32
    %8 = vector.broadcast %cst_7 : f32 to vector<8x128xf32>
    %9 = arith.maximumf %7, %8 : vector<8x128xf32>
    %c0_8 = arith.constant 0 : index
    %c0_9 = arith.constant 0 : index
    %c0_10 = arith.constant 0 : index
    %c0_11 = arith.constant 0 : index
    %10 = vector.load %arg4[%c0_8, %c0_9, %c0_10, %c0_11] : memref<4x1x128x128xf32, #tpu.memory_space<vmem>>, vector<1x1x128x128xf32>
    %11 = vector.shape_cast %10 : vector<1x1x128x128xf32> to vector<128x128xf32>
    %cst_12 = arith.constant dense<0.000000e+00> : vector<8x128xf32>
    %12 = tpu.matmul %9, %11, %cst_12 {dimension_numbers = #tpu.dot_dimension_numbers<[1], [0], [0], [1], [0, 0, 1, 1], [], []>} : vector<8x128xf32>, vector<128x128xf32>, vector<8x128xf32> -> vector<8x128xf32>
    %c0_13 = arith.constant 0 : index
    %c0_14 = arith.constant 0 : index
    %c0_15 = arith.constant 0 : index
    %c0_16 = arith.constant 0 : index
    %13 = vector.load %arg5[%c0_13, %c0_14, %c0_15, %c0_16] : memref<4x1x1x128xf32, #tpu.memory_space<vmem>>, vector<1x1x1x128xf32>
    %14 = vector.shape_cast %13 : vector<1x1x1x128xf32> to vector<1x128xf32>
    %15 = vector.broadcast %14 : vector<1x128xf32> to vector<8x128xf32>
    %16 = arith.addf %12, %15 : vector<8x128xf32>
    %cst_17 = arith.constant dense<0.000000e+00> : vector<8x4xf32>
    %17 = tpu.matmul %16, %6, %cst_17 {dimension_numbers = #tpu.dot_dimension_numbers<[1], [0], [0], [1], [0, 0, 1, 1], [], []>} : vector<8x128xf32>, vector<128x4xf32>, vector<8x4xf32> -> vector<8x4xf32>
    %18 = vector.extract_strided_slice %5 {offsets = [0, 128], sizes = [8, 128], strides = [1, 1]} : vector<8x640xf32> to vector<8x128xf32>
    %cst_18 = arith.constant 0.000000e+00 : f32
    %19 = vector.broadcast %cst_18 : f32 to vector<8x128xf32>
    %20 = arith.maximumf %18, %19 : vector<8x128xf32>
    %c1 = arith.constant 1 : index
    %c0_19 = arith.constant 0 : index
    %c0_20 = arith.constant 0 : index
    %c0_21 = arith.constant 0 : index
    %21 = vector.load %arg4[%c1, %c0_19, %c0_20, %c0_21] : memref<4x1x128x128xf32, #tpu.memory_space<vmem>>, vector<1x1x128x128xf32>
    %22 = vector.shape_cast %21 : vector<1x1x128x128xf32> to vector<128x128xf32>
    %cst_22 = arith.constant dense<0.000000e+00> : vector<8x128xf32>
    %23 = tpu.matmul %20, %22, %cst_22 {dimension_numbers = #tpu.dot_dimension_numbers<[1], [0], [0], [1], [0, 0, 1, 1], [], []>} : vector<8x128xf32>, vector<128x128xf32>, vector<8x128xf32> -> vector<8x128xf32>
    %c1_23 = arith.constant 1 : index
    %c0_24 = arith.constant 0 : index
    %c0_25 = arith.constant 0 : index
    %c0_26 = arith.constant 0 : index
    %24 = vector.load %arg5[%c1_23, %c0_24, %c0_25, %c0_26] : memref<4x1x1x128xf32, #tpu.memory_space<vmem>>, vector<1x1x1x128xf32>
    %25 = vector.shape_cast %24 : vector<1x1x1x128xf32> to vector<1x128xf32>
    %26 = vector.broadcast %25 : vector<1x128xf32> to vector<8x128xf32>
    %27 = arith.addf %23, %26 : vector<8x128xf32>
    %cst_27 = arith.constant dense<0.000000e+00> : vector<8x4xf32>
    %28 = tpu.matmul %27, %6, %cst_27 {dimension_numbers = #tpu.dot_dimension_numbers<[1], [0], [0], [1], [0, 0, 1, 1], [], []>} : vector<8x128xf32>, vector<128x4xf32>, vector<8x4xf32> -> vector<8x4xf32>
    %29 = vector.extract_strided_slice %5 {offsets = [0, 256], sizes = [8, 128], strides = [1, 1]} : vector<8x640xf32> to vector<8x128xf32>
    %cst_28 = arith.constant 0.000000e+00 : f32
    %30 = vector.broadcast %cst_28 : f32 to vector<8x128xf32>
    %31 = arith.maximumf %29, %30 : vector<8x128xf32>
    %c2 = arith.constant 2 : index
    %c0_29 = arith.constant 0 : index
    %c0_30 = arith.constant 0 : index
    %c0_31 = arith.constant 0 : index
    %32 = vector.load %arg4[%c2, %c0_29, %c0_30, %c0_31] : memref<4x1x128x128xf32, #tpu.memory_space<vmem>>, vector<1x1x128x128xf32>
    %33 = vector.shape_cast %32 : vector<1x1x128x128xf32> to vector<128x128xf32>
    %cst_32 = arith.constant dense<0.000000e+00> : vector<8x128xf32>
    %34 = tpu.matmul %31, %33, %cst_32 {dimension_numbers = #tpu.dot_dimension_numbers<[1], [0], [0], [1], [0, 0, 1, 1], [], []>} : vector<8x128xf32>, vector<128x128xf32>, vector<8x128xf32> -> vector<8x128xf32>
    %c2_33 = arith.constant 2 : index
    %c0_34 = arith.constant 0 : index
    %c0_35 = arith.constant 0 : index
    %c0_36 = arith.constant 0 : index
    %35 = vector.load %arg5[%c2_33, %c0_34, %c0_35, %c0_36] : memref<4x1x1x128xf32, #tpu.memory_space<vmem>>, vector<1x1x1x128xf32>
    %36 = vector.shape_cast %35 : vector<1x1x1x128xf32> to vector<1x128xf32>
    %37 = vector.broadcast %36 : vector<1x128xf32> to vector<8x128xf32>
    %38 = arith.addf %34, %37 : vector<8x128xf32>
    %cst_37 = arith.constant dense<0.000000e+00> : vector<8x4xf32>
    %39 = tpu.matmul %38, %6, %cst_37 {dimension_numbers = #tpu.dot_dimension_numbers<[1], [0], [0], [1], [0, 0, 1, 1], [], []>} : vector<8x128xf32>, vector<128x4xf32>, vector<8x4xf32> -> vector<8x4xf32>
    %40 = vector.extract_strided_slice %5 {offsets = [0, 384], sizes = [8, 128], strides = [1, 1]} : vector<8x640xf32> to vector<8x128xf32>
    %cst_38 = arith.constant 0.000000e+00 : f32
    %41 = vector.broadcast %cst_38 : f32 to vector<8x128xf32>
    %42 = arith.maximumf %40, %41 : vector<8x128xf32>
    %c3 = arith.constant 3 : index
    %c0_39 = arith.constant 0 : index
    %c0_40 = arith.constant 0 : index
    %c0_41 = arith.constant 0 : index
    %43 = vector.load %arg4[%c3, %c0_39, %c0_40, %c0_41] : memref<4x1x128x128xf32, #tpu.memory_space<vmem>>, vector<1x1x128x128xf32>
    %44 = vector.shape_cast %43 : vector<1x1x128x128xf32> to vector<128x128xf32>
    %cst_42 = arith.constant dense<0.000000e+00> : vector<8x128xf32>
    %45 = tpu.matmul %42, %44, %cst_42 {dimension_numbers = #tpu.dot_dimension_numbers<[1], [0], [0], [1], [0, 0, 1, 1], [], []>} : vector<8x128xf32>, vector<128x128xf32>, vector<8x128xf32> -> vector<8x128xf32>
    %c3_43 = arith.constant 3 : index
    %c0_44 = arith.constant 0 : index
    %c0_45 = arith.constant 0 : index
    %c0_46 = arith.constant 0 : index
    %46 = vector.load %arg5[%c3_43, %c0_44, %c0_45, %c0_46] : memref<4x1x1x128xf32, #tpu.memory_space<vmem>>, vector<1x1x1x128xf32>
    %47 = vector.shape_cast %46 : vector<1x1x1x128xf32> to vector<1x128xf32>
    %48 = vector.broadcast %47 : vector<1x128xf32> to vector<8x128xf32>
    %49 = arith.addf %45, %48 : vector<8x128xf32>
    %cst_47 = arith.constant dense<0.000000e+00> : vector<8x4xf32>
    %50 = tpu.matmul %49, %6, %cst_47 {dimension_numbers = #tpu.dot_dimension_numbers<[1], [0], [0], [1], [0, 0, 1, 1], [], []>} : vector<8x128xf32>, vector<128x4xf32>, vector<8x4xf32> -> vector<8x4xf32>
    %51 = tpu.iota {dimensions = array<i32: 1>} : vector<1x4xi32>
    %cst_48 = arith.constant 0.000000e+00 : f32
    %52 = vector.broadcast %cst_48 : f32 to vector<8x4xf32>
    %53 = vector.extract_strided_slice %5 {offsets = [0, 512], sizes = [8, 4], strides = [1, 1]} : vector<8x640xf32> to vector<8x4xf32>
    %cst_49 = arith.constant dense<0xFF800000> : vector<8xf32>
    %54 = vector.multi_reduction <maximumf>, %53, %cst_49 [1] : vector<8x4xf32> to vector<8xf32>
    %55 = vector.shape_cast %54 : vector<8xf32> to vector<8x1xf32>
    %56 = vector.broadcast %55 : vector<8x1xf32> to vector<8x4xf32>
    %57 = arith.subf %53, %56 : vector<8x4xf32>
    %58 = math.exp %57 : vector<8x4xf32>
    %cst_50 = arith.constant dense<0.000000e+00> : vector<8xf32>
    %59 = vector.multi_reduction <add>, %58, %cst_50 [1] : vector<8x4xf32> to vector<8xf32>
    %60 = vector.shape_cast %59 : vector<8xf32> to vector<8x1xf32>
    %61 = tpu.reciprocal %60 {approx = true} : vector<8x1xf32> -> vector<8x1xf32>
    %62 = vector.broadcast %61 : vector<8x1xf32> to vector<8x4xf32>
    %63 = arith.mulf %58, %62 : vector<8x4xf32>
    %64 = vector.extract_strided_slice %63 {offsets = [0, 0], sizes = [8, 1], strides = [1, 1]} : vector<8x4xf32> to vector<8x1xf32>
    %65 = vector.broadcast %64 : vector<8x1xf32> to vector<8x4xf32>
    %66 = arith.mulf %65, %17 : vector<8x4xf32>
    %67 = vector.extract_strided_slice %63 {offsets = [0, 1], sizes = [8, 1], strides = [1, 1]} : vector<8x4xf32> to vector<8x1xf32>
    %68 = vector.broadcast %67 : vector<8x1xf32> to vector<8x4xf32>
    %69 = arith.mulf %68, %28 : vector<8x4xf32>
    %70 = arith.addf %66, %69 : vector<8x4xf32>
    %71 = vector.extract_strided_slice %63 {offsets = [0, 2], sizes = [8, 1], strides = [1, 1]} : vector<8x4xf32> to vector<8x1xf32>
    %72 = vector.broadcast %71 : vector<8x1xf32> to vector<8x4xf32>
    %73 = arith.mulf %72, %39 : vector<8x4xf32>
    %74 = arith.addf %70, %73 : vector<8x4xf32>
    %75 = vector.extract_strided_slice %63 {offsets = [0, 3], sizes = [8, 1], strides = [1, 1]} : vector<8x4xf32> to vector<8x1xf32>
    %76 = vector.broadcast %75 : vector<8x1xf32> to vector<8x4xf32>
    %77 = arith.mulf %76, %50 : vector<8x4xf32>
    %78 = arith.addf %74, %77 : vector<8x4xf32>
    %c0_i32 = arith.constant 0 : i32
    %79 = vector.broadcast %c0_i32 : i32 to vector<1x4xi32>
    %80 = arith.cmpi eq, %51, %79 : vector<1x4xi32>
    %cst_51 = arith.constant 0.000000e+00 : f32
    %81 = vector.shape_cast %80 : vector<1x4xi1> to vector<1x4xi1>
    %82 = vector.broadcast %81 : vector<1x4xi1> to vector<8x4xi1>
    %83 = vector.broadcast %cst_51 : f32 to vector<8x4xf32>
    %84 = arith.select %82, %78, %83 : vector<8x4xi1>, vector<8x4xf32>
    %85 = arith.addf %52, %84 : vector<8x4xf32>
    %86 = vector.extract_strided_slice %5 {offsets = [0, 516], sizes = [8, 4], strides = [1, 1]} : vector<8x640xf32> to vector<8x4xf32>
    %cst_52 = arith.constant dense<0xFF800000> : vector<8xf32>
    %87 = vector.multi_reduction <maximumf>, %86, %cst_52 [1] : vector<8x4xf32> to vector<8xf32>
    %88 = vector.shape_cast %87 : vector<8xf32> to vector<8x1xf32>
    %89 = vector.broadcast %88 : vector<8x1xf32> to vector<8x4xf32>
    %90 = arith.subf %86, %89 : vector<8x4xf32>
    %91 = math.exp %90 : vector<8x4xf32>
    %cst_53 = arith.constant dense<0.000000e+00> : vector<8xf32>
    %92 = vector.multi_reduction <add>, %91, %cst_53 [1] : vector<8x4xf32> to vector<8xf32>
    %93 = vector.shape_cast %92 : vector<8xf32> to vector<8x1xf32>
    %94 = tpu.reciprocal %93 {approx = true} : vector<8x1xf32> -> vector<8x1xf32>
    %95 = vector.broadcast %94 : vector<8x1xf32> to vector<8x4xf32>
    %96 = arith.mulf %91, %95 : vector<8x4xf32>
    %97 = vector.extract_strided_slice %96 {offsets = [0, 0], sizes = [8, 1], strides = [1, 1]} : vector<8x4xf32> to vector<8x1xf32>
    %98 = vector.broadcast %97 : vector<8x1xf32> to vector<8x4xf32>
    %99 = arith.mulf %98, %17 : vector<8x4xf32>
    %100 = vector.extract_strided_slice %96 {offsets = [0, 1], sizes = [8, 1], strides = [1, 1]} : vector<8x4xf32> to vector<8x1xf32>
    %101 = vector.broadcast %100 : vector<8x1xf32> to vector<8x4xf32>
    %102 = arith.mulf %101, %28 : vector<8x4xf32>
    %103 = arith.addf %99, %102 : vector<8x4xf32>
    %104 = vector.extract_strided_slice %96 {offsets = [0, 2], sizes = [8, 1], strides = [1, 1]} : vector<8x4xf32> to vector<8x1xf32>
    %105 = vector.broadcast %104 : vector<8x1xf32> to vector<8x4xf32>
    %106 = arith.mulf %105, %39 : vector<8x4xf32>
    %107 = arith.addf %103, %106 : vector<8x4xf32>
    %108 = vector.extract_strided_slice %96 {offsets = [0, 3], sizes = [8, 1], strides = [1, 1]} : vector<8x4xf32> to vector<8x1xf32>
    %109 = vector.broadcast %108 : vector<8x1xf32> to vector<8x4xf32>
    %110 = arith.mulf %109, %50 : vector<8x4xf32>
    %111 = arith.addf %107, %110 : vector<8x4xf32>
    %c1_i32 = arith.constant 1 : i32
    %112 = vector.broadcast %c1_i32 : i32 to vector<1x4xi32>
    %113 = arith.cmpi eq, %51, %112 : vector<1x4xi32>
    %cst_54 = arith.constant 0.000000e+00 : f32
    %114 = vector.shape_cast %113 : vector<1x4xi1> to vector<1x4xi1>
    %115 = vector.broadcast %114 : vector<1x4xi1> to vector<8x4xi1>
    %116 = vector.broadcast %cst_54 : f32 to vector<8x4xf32>
    %117 = arith.select %115, %111, %116 : vector<8x4xi1>, vector<8x4xf32>
    %118 = arith.addf %85, %117 : vector<8x4xf32>
    %119 = vector.extract_strided_slice %5 {offsets = [0, 520], sizes = [8, 4], strides = [1, 1]} : vector<8x640xf32> to vector<8x4xf32>
    %cst_55 = arith.constant dense<0xFF800000> : vector<8xf32>
    %120 = vector.multi_reduction <maximumf>, %119, %cst_55 [1] : vector<8x4xf32> to vector<8xf32>
    %121 = vector.shape_cast %120 : vector<8xf32> to vector<8x1xf32>
    %122 = vector.broadcast %121 : vector<8x1xf32> to vector<8x4xf32>
    %123 = arith.subf %119, %122 : vector<8x4xf32>
    %124 = math.exp %123 : vector<8x4xf32>
    %cst_56 = arith.constant dense<0.000000e+00> : vector<8xf32>
    %125 = vector.multi_reduction <add>, %124, %cst_56 [1] : vector<8x4xf32> to vector<8xf32>
    %126 = vector.shape_cast %125 : vector<8xf32> to vector<8x1xf32>
    %127 = tpu.reciprocal %126 {approx = true} : vector<8x1xf32> -> vector<8x1xf32>
    %128 = vector.broadcast %127 : vector<8x1xf32> to vector<8x4xf32>
    %129 = arith.mulf %124, %128 : vector<8x4xf32>
    %130 = vector.extract_strided_slice %129 {offsets = [0, 0], sizes = [8, 1], strides = [1, 1]} : vector<8x4xf32> to vector<8x1xf32>
    %131 = vector.broadcast %130 : vector<8x1xf32> to vector<8x4xf32>
    %132 = arith.mulf %131, %17 : vector<8x4xf32>
    %133 = vector.extract_strided_slice %129 {offsets = [0, 1], sizes = [8, 1], strides = [1, 1]} : vector<8x4xf32> to vector<8x1xf32>
    %134 = vector.broadcast %133 : vector<8x1xf32> to vector<8x4xf32>
    %135 = arith.mulf %134, %28 : vector<8x4xf32>
    %136 = arith.addf %132, %135 : vector<8x4xf32>
    %137 = vector.extract_strided_slice %129 {offsets = [0, 2], sizes = [8, 1], strides = [1, 1]} : vector<8x4xf32> to vector<8x1xf32>
    %138 = vector.broadcast %137 : vector<8x1xf32> to vector<8x4xf32>
    %139 = arith.mulf %138, %39 : vector<8x4xf32>
    %140 = arith.addf %136, %139 : vector<8x4xf32>
    %141 = vector.extract_strided_slice %129 {offsets = [0, 3], sizes = [8, 1], strides = [1, 1]} : vector<8x4xf32> to vector<8x1xf32>
    %142 = vector.broadcast %141 : vector<8x1xf32> to vector<8x4xf32>
    %143 = arith.mulf %142, %50 : vector<8x4xf32>
    %144 = arith.addf %140, %143 : vector<8x4xf32>
    %c2_i32 = arith.constant 2 : i32
    %145 = vector.broadcast %c2_i32 : i32 to vector<1x4xi32>
    %146 = arith.cmpi eq, %51, %145 : vector<1x4xi32>
    %cst_57 = arith.constant 0.000000e+00 : f32
    %147 = vector.shape_cast %146 : vector<1x4xi1> to vector<1x4xi1>
    %148 = vector.broadcast %147 : vector<1x4xi1> to vector<8x4xi1>
    %149 = vector.broadcast %cst_57 : f32 to vector<8x4xf32>
    %150 = arith.select %148, %144, %149 : vector<8x4xi1>, vector<8x4xf32>
    %151 = arith.addf %118, %150 : vector<8x4xf32>
    %152 = vector.extract_strided_slice %5 {offsets = [0, 524], sizes = [8, 4], strides = [1, 1]} : vector<8x640xf32> to vector<8x4xf32>
    %cst_58 = arith.constant dense<0xFF800000> : vector<8xf32>
    %153 = vector.multi_reduction <maximumf>, %152, %cst_58 [1] : vector<8x4xf32> to vector<8xf32>
    %154 = vector.shape_cast %153 : vector<8xf32> to vector<8x1xf32>
    %155 = vector.broadcast %154 : vector<8x1xf32> to vector<8x4xf32>
    %156 = arith.subf %152, %155 : vector<8x4xf32>
    %157 = math.exp %156 : vector<8x4xf32>
    %cst_59 = arith.constant dense<0.000000e+00> : vector<8xf32>
    %158 = vector.multi_reduction <add>, %157, %cst_59 [1] : vector<8x4xf32> to vector<8xf32>
    %159 = vector.shape_cast %158 : vector<8xf32> to vector<8x1xf32>
    %160 = tpu.reciprocal %159 {approx = true} : vector<8x1xf32> -> vector<8x1xf32>
    %161 = vector.broadcast %160 : vector<8x1xf32> to vector<8x4xf32>
    %162 = arith.mulf %157, %161 : vector<8x4xf32>
    %163 = vector.extract_strided_slice %162 {offsets = [0, 0], sizes = [8, 1], strides = [1, 1]} : vector<8x4xf32> to vector<8x1xf32>
    %164 = vector.broadcast %163 : vector<8x1xf32> to vector<8x4xf32>
    %165 = arith.mulf %164, %17 : vector<8x4xf32>
    %166 = vector.extract_strided_slice %162 {offsets = [0, 1], sizes = [8, 1], strides = [1, 1]} : vector<8x4xf32> to vector<8x1xf32>
    %167 = vector.broadcast %166 : vector<8x1xf32> to vector<8x4xf32>
    %168 = arith.mulf %167, %28 : vector<8x4xf32>
    %169 = arith.addf %165, %168 : vector<8x4xf32>
    %170 = vector.extract_strided_slice %162 {offsets = [0, 2], sizes = [8, 1], strides = [1, 1]} : vector<8x4xf32> to vector<8x1xf32>
    %171 = vector.broadcast %170 : vector<8x1xf32> to vector<8x4xf32>
    %172 = arith.mulf %171, %39 : vector<8x4xf32>
    %173 = arith.addf %169, %172 : vector<8x4xf32>
    %174 = vector.extract_strided_slice %162 {offsets = [0, 3], sizes = [8, 1], strides = [1, 1]} : vector<8x4xf32> to vector<8x1xf32>
    %175 = vector.broadcast %174 : vector<8x1xf32> to vector<8x4xf32>
    %176 = arith.mulf %175, %50 : vector<8x4xf32>
    %177 = arith.addf %173, %176 : vector<8x4xf32>
    %c3_i32 = arith.constant 3 : i32
    %178 = vector.broadcast %c3_i32 : i32 to vector<1x4xi32>
    %179 = arith.cmpi eq, %51, %178 : vector<1x4xi32>
    %cst_60 = arith.constant 0.000000e+00 : f32
    %180 = vector.shape_cast %179 : vector<1x4xi1> to vector<1x4xi1>
    %181 = vector.broadcast %180 : vector<1x4xi1> to vector<8x4xi1>
    %182 = vector.broadcast %cst_60 : f32 to vector<8x4xf32>
    %183 = arith.select %181, %177, %182 : vector<8x4xi1>, vector<8x4xf32>
    %184 = arith.addf %151, %183 : vector<8x4xf32>
    %c0_61 = arith.constant 0 : index
    %c0_62 = arith.constant 0 : index
    %185 = vector.load %arg7[%c0_61, %c0_62] : memref<1x4xf32, #tpu.memory_space<vmem>>, vector<1x4xf32>
    %186 = vector.broadcast %185 : vector<1x4xf32> to vector<8x4xf32>
    %187 = arith.addf %184, %186 : vector<8x4xf32>
    %c0_63 = arith.constant 0 : index
    %c0_64 = arith.constant 0 : index
    %188 = vector.load %arg8[%c0_63, %c0_64] : memref<8x4xf32, #tpu.memory_space<vmem>>, vector<8x4xf32>
    tpu.vector_store %arg8[%c0_63, %c0_64], %187 {strides = array<i32>} : memref<8x4xf32, #tpu.memory_space<vmem>>, vector<8x4xf32>,
    return
  }
  func.func @transform_0(%arg0: i32) -> (i32, i32) {
    %c0_i32 = arith.constant 0 : i32
    %c0_i32_0 = arith.constant 0 : i32
    return %arg0, %c0_i32 : i32, i32
  }
  func.func @transform_1(%arg0: i32) -> (i32, i32) {
    %c0_i32 = arith.constant 0 : i32
    %c0_i32_0 = arith.constant 0 : i32
    %c0_i32_1 = arith.constant 0 : i32
    return %c0_i32, %c0_i32_0 : i32, i32
  }
  func.func @transform_2(%arg0: i32) -> (i32, i32) {
    %c0_i32 = arith.constant 0 : i32
    %c0_i32_0 = arith.constant 0 : i32
    %c0_i32_1 = arith.constant 0 : i32
    return %c0_i32, %c0_i32_0 : i32, i32
  }
  func.func @transform_3(%arg0: i32) -> (i32, i32, i32, i32) {
    %c0_i32 = arith.constant 0 : i32
    %c0_i32_0 = arith.constant 0 : i32
    %c0_i32_1 = arith.constant 0 : i32
    %c0_i32_2 = arith.constant 0 : i32
    %c0_i32_3 = arith.constant 0 : i32
    return %c0_i32, %c0_i32_0, %c0_i32_1, %c0_i32_2 : i32, i32, i32, i32
  }
  func.func @transform_4(%arg0: i32) -> (i32, i32, i32, i32) {
    %c0_i32 = arith.constant 0 : i32
    %c0_i32_0 = arith.constant 0 : i32
    %c0_i32_1 = arith.constant 0 : i32
    %c0_i32_2 = arith.constant 0 : i32
    %c0_i32_3 = arith.constant 0 : i32
    return %c0_i32, %c0_i32_0, %c0_i32_1, %c0_i32_2 : i32, i32, i32, i32
  }
  func.func @transform_5(%arg0: i32) -> (i32, i32) {
    %c0_i32 = arith.constant 0 : i32
    %c0_i32_0 = arith.constant 0 : i32
    %c0_i32_1 = arith.constant 0 : i32
    return %c0_i32, %c0_i32_0 : i32, i32
  }
  func.func @transform_6(%arg0: i32) -> (i32, i32) {
    %c0_i32 = arith.constant 0 : i32
    %c0_i32_0 = arith.constant 0 : i32
    %c0_i32_1 = arith.constant 0 : i32
    return %c0_i32, %c0_i32_0 : i32, i32
  }
  func.func @transform_7(%arg0: i32) -> (i32, i32) {
    %c0_i32 = arith.constant 0 : i32
    %c0_i32_0 = arith.constant 0 : i32
    return %arg0, %c0_i32 : i32, i32
  }
}

</mosaic_0001>

<llo_original>
// kernel: tpu_custom_call.1
$region0: #{tpu_custom_call.1}
  #allocation0 [shape = 'u32[]', space=smem, size = 0x4, offset = 0x4, fixed_abs, tag = 'smem constant byte address 0x4 - core index']
  #allocation1 [shape = 'u32[72,128]{1,0:T(1,128)}', space=vmem, size = 0x9000, scoped, tag = 'internal scratch']
  %s0 = inlined_call_operand.vmem [shape: f32[8,8], index: 0, kind: input, shape index: {}]
  %s1 = inlined_call_operand.vmem [shape: f32[8,640], index: 1, kind: input, shape index: {}]
  %s2 = inlined_call_operand.vmem [shape: f32[1,640], index: 2, kind: input, shape index: {}]
  %s3 = inlined_call_operand.hbm [shape: f32[4,1,128,128], index: 3, kind: input, shape index: {}]
  %s4 = inlined_call_operand.vmem [shape: f32[4,1,1,128], index: 4, kind: input, shape index: {}]
  %s5 = inlined_call_operand.vmem [shape: f32[128,4], index: 5, kind: input, shape index: {}]
  %s6 = inlined_call_operand.vmem [shape: f32[1,4], index: 6, kind: input, shape index: {}]
  %s7 = inlined_call_operand.vmem [shape: f32[8,4], index: 7, kind: output, shape index: {}]
  %s8 = sld [smem:[#allocation0]]
  $region42: #{tpu_custom_call.1} parent=0
    _
  %s10 = ssub.s32 1, %s8
  %s11 = scalar_select 0, %s10, %s8
  $region1: #{tpu_custom_call.1} parent=0
    #allocation2 [shape = 'u8[262144]{0}', space=vmem, size = 0x40000, scoped, tag = 'input window, operand 3, single buffered']
    #allocation3 [shape = 's32[1]{0}', space=sflag, size = 0x4, scoped, tag = 'scoped memory for tpu_custom_call.1']
    %12 = vsyncpa [#allocation3], 0
    // Predicated region
    $region2: #{tpu_custom_call.1} parent=1 // pred_check
      _
    $region3: #{tpu_custom_call.1} parent=1 // pred_check_branch
      %14 = sbr.rel (0) target = $region5
    $region4: #{tpu_custom_call.1} parent=1 // pred_region
      _
    $region5: #{tpu_custom_call.1} parent=1 // pred_fallthru
      _
    // Predicated region
    $region6: #{tpu_custom_call.1} parent=1 // pred_check
      _
    $region7: #{tpu_custom_call.1} parent=1 // pred_check_branch
      %16 = sbr.rel (0) target = $region9
    $region8: #{tpu_custom_call.1} parent=1 // pred_region
      _
    $region9: #{tpu_custom_call.1} parent=1 // pred_fallthru
      _
    // Predicated region
    $region10: #{tpu_custom_call.1} parent=1 // pred_check
      _
    $region11: #{tpu_custom_call.1} parent=1 // pred_check_branch
      %18 = sbr.rel (0) target = $region13
    $region12: #{tpu_custom_call.1} parent=1 // pred_region
      _
    $region13: #{tpu_custom_call.1} parent=1 // pred_fallthru
      _
    // Predicated region
    $region14: #{tpu_custom_call.1} parent=1 // pred_check
      _
    $region15: #{tpu_custom_call.1} parent=1 // pred_check_branch
      %20 = sbr.rel (0) target = $region17
    $region16: #{tpu_custom_call.1} parent=1 // pred_region
      %22 = vsyncadd [#allocation3], 0
      %s23 = sshll.u32 %s3, 4
      %s24 = int_to_ptr.hbm [resolvable:$true] %s23
      %s25 = sshll.u32 [#allocation2], 4
      %s26 = int_to_ptr.vmem [resolvable:$true] %s25
      %31 = dma.hbm_to_vmem [thread:$0]  %s24, 8192, %s26, [#allocation3], 128, 128, 8
    $region17: #{tpu_custom_call.1} parent=1 // pred_fallthru
      _
    // Predicated region
    $region18: #{tpu_custom_call.1} parent=1 // pred_check
      _
    $region19: #{tpu_custom_call.1} parent=1 // pred_check_branch
      %33 = sbr.rel (0) target = $region21
    $region20: #{tpu_custom_call.1} parent=1 // pred_region
      _
    $region21: #{tpu_custom_call.1} parent=1 // pred_fallthru
      _
    // Predicated region
    $region22: #{tpu_custom_call.1} parent=1 // pred_check
      _
    $region23: #{tpu_custom_call.1} parent=1 // pred_check_branch
      %35 = sbr.rel (0) target = $region25
    $region24: #{tpu_custom_call.1} parent=1 // pred_region
      _
    $region25: #{tpu_custom_call.1} parent=1 // pred_fallthru
      _
    // Predicated region
    $region26: #{tpu_custom_call.1} parent=1 // pred_check
      _
    $region27: #{tpu_custom_call.1} parent=1 // pred_check_branch
      %37 = sbr.rel (0) target = $region29
    $region28: #{tpu_custom_call.1} parent=1 // pred_region
      _
    $region29: #{tpu_custom_call.1} parent=1 // pred_fallthru
      _
    // Predicated region
    $region30: #{tpu_custom_call.1} parent=1 // pred_check
      _
    $region31: #{tpu_custom_call.1} parent=1 // pred_check_branch
      %39 = sbr.rel (0) target = $region33
    $region32: #{tpu_custom_call.1} parent=1 // pred_region
      %41 = dma.done [#allocation3], 8192
    $region33: #{tpu_custom_call.1} parent=1 // pred_fallthru
      _
    %v42 = vld [vmem:[%s0] sm:$0xff]
    %v43 = vld [vmem:[%s1] sm:$0xff]
    %v44 = vld [vmem:[%s1 + $0x8] sm:$0xff]
    %v45 = vld [vmem:[%s1 + $0x10] sm:$0xff]
    %v46 = vld [vmem:[%s1 + $0x18] sm:$0xff]
    %v47 = vld [vmem:[%s1 + $0x20] sm:$0xff]
    %v48 = vld [vmem:[%s2] sm:$0x1f]
    %v50 = vperm.slane %v48, 0
    %v51 = vperm.slane %v48, 1
    %v52 = vperm.slane %v48, 2
    %v53 = vperm.slane %v48, 3
    %v54 = vperm.slane %v48, 4
    %vm60 = vcmask 64512
    %v62 = vsel %vm60, %v42, 0
    %64 = vmatpush.msra.mxu0 0.0
    %65 = vmatpush.msra.mxu0 0.0
    %66 = vmatpush.msra.mxu0 0.0
    %67 = vmatpush.msra.mxu0 0.0
    %68 = vmatpush.msra.mxu0 0.0
    %69 = vmatpush.msra.mxu0 0.0
    %70 = vmatpush.msra.mxu0 0.0
    %71 = vmatpush.msra.mxu0 0.0
    %72 = vmatpush.msra.mxu0 0.0
    %73 = vmatpush.msra.mxu0 0.0
    %74 = vmatpush.msra.mxu0 0.0
    %75 = vmatpush.msra.mxu0 0.0
    %76 = vmatpush.msra.mxu0 0.0
    %77 = vmatpush.msra.mxu0 0.0
    %78 = vmatpush.msra.mxu0 0.0
    %79 = vmatpush.msra.mxu0 %v43
    %80 = vmatmul.f32.gmra.mxu0 %v62
    %v81 = vpop.f32.mrf.mxu0
    %v82 = vadd.f32 %v50, %v81
    %83 = vdwg.mxu0
    %84 = vmatpush.msra.mxu0 0.0
    %85 = vmatpush.msra.mxu0 0.0
    %86 = vmatpush.msra.mxu0 0.0
    %87 = vmatpush.msra.mxu0 0.0
    %88 = vmatpush.msra.mxu0 0.0
    %89 = vmatpush.msra.mxu0 0.0
    %90 = vmatpush.msra.mxu0 0.0
    %91 = vmatpush.msra.mxu0 0.0
    %92 = vmatpush.msra.mxu0 0.0
    %93 = vmatpush.msra.mxu0 0.0
    %94 = vmatpush.msra.mxu0 0.0
    %95 = vmatpush.msra.mxu0 0.0
    %96 = vmatpush.msra.mxu0 0.0
    %97 = vmatpush.msra.mxu0 0.0
    %98 = vmatpush.msra.mxu0 0.0
    %99 = vmatpush.msra.mxu0 %v44
    %100 = vmatmul.f32.gmra.mxu0 %v62
    %v101 = vpop.f32.mrf.mxu0
    %v102 = vadd.f32 %v51, %v101
    %103 = vdwg.mxu0
    %104 = vmatpush.msra.mxu0 0.0
    %105 = vmatpush.msra.mxu0 0.0
    %106 = vmatpush.msra.mxu0 0.0
    %107 = vmatpush.msra.mxu0 0.0
    %108 = vmatpush.msra.mxu0 0.0
    %109 = vmatpush.msra.mxu0 0.0
    %110 = vmatpush.msra.mxu0 0.0
    %111 = vmatpush.msra.mxu0 0.0
    %112 = vmatpush.msra.mxu0 0.0
    %113 = vmatpush.msra.mxu0 0.0
    %114 = vmatpush.msra.mxu0 0.0
    %115 = vmatpush.msra.mxu0 0.0
    %116 = vmatpush.msra.mxu0 0.0
    %117 = vmatpush.msra.mxu0 0.0
    %118 = vmatpush.msra.mxu0 0.0
    %119 = vmatpush.msra.mxu0 %v45
    %120 = vmatmul.f32.gmra.mxu0 %v62
    %v121 = vpop.f32.mrf.mxu0
    %v122 = vadd.f32 %v52, %v121
    %123 = vdwg.mxu0
    %124 = vmatpush.msra.mxu0 0.0
    %125 = vmatpush.msra.mxu0 0.0
    %126 = vmatpush.msra.mxu0 0.0
    %127 = vmatpush.msra.mxu0 0.0
    %128 = vmatpush.msra.mxu0 0.0
    %129 = vmatpush.msra.mxu0 0.0
    %130 = vmatpush.msra.mxu0 0.0
    %131 = vmatpush.msra.mxu0 0.0
    %132 = vmatpush.msra.mxu0 0.0
    %133 = vmatpush.msra.mxu0 0.0
    %134 = vmatpush.msra.mxu0 0.0
    %135 = vmatpush.msra.mxu0 0.0
    %136 = vmatpush.msra.mxu0 0.0
    %137 = vmatpush.msra.mxu0 0.0
    %138 = vmatpush.msra.mxu0 0.0
    %139 = vmatpush.msra.mxu0 %v46
    %140 = vmatmul.f32.gmra.mxu0 %v62
    %v141 = vpop.f32.mrf.mxu0
    %v142 = vadd.f32 %v53, %v141
    %143 = vdwg.mxu0
    %144 = vmatpush.msra.mxu0 0.0
    %145 = vmatpush.msra.mxu0 0.0
    %146 = vmatpush.msra.mxu0 0.0
    %147 = vmatpush.msra.mxu0 0.0
    %148 = vmatpush.msra.mxu0 0.0
    %149 = vmatpush.msra.mxu0 0.0
    %150 = vmatpush.msra.mxu0 0.0
    %151 = vmatpush.msra.mxu0 0.0
    %152 = vmatpush.msra.mxu0 0.0
    %153 = vmatpush.msra.mxu0 0.0
    %154 = vmatpush.msra.mxu0 0.0
    %155 = vmatpush.msra.mxu0 0.0
    %156 = vmatpush.msra.mxu0 0.0
    %157 = vmatpush.msra.mxu0 0.0
    %158 = vmatpush.msra.mxu0 0.0
    %159 = vmatpush.msra.mxu0 %v47
    %160 = vmatmul.f32.gmra.mxu0 %v62
    %v161 = vpop.f32.mrf.mxu0
    %v162 = vadd.f32 %v54, %v161
    %163 = vdwg.mxu0
    %v164 = vld [vmem:[%s5] sm:$0xff]
    %v165 = vld [vmem:[%s5 + $0x8] sm:$0xff]
    %v166 = vld [vmem:[%s5 + $0x10] sm:$0xff]
    %v167 = vld [vmem:[%s5 + $0x18] sm:$0xff]
    %v168 = vld [vmem:[%s5 + $0x20] sm:$0xff]
    %v169 = vld [vmem:[%s5 + $0x28] sm:$0xff]
    %v170 = vld [vmem:[%s5 + $0x30] sm:$0xff]
    %v171 = vld [vmem:[%s5 + $0x38] sm:$0xff]
    %v172 = vld [vmem:[%s5 + $0x40] sm:$0xff]
    %v173 = vld [vmem:[%s5 + $0x48] sm:$0xff]
    %v174 = vld [vmem:[%s5 + $0x50] sm:$0xff]
    %v175 = vld [vmem:[%s5 + $0x58] sm:$0xff]
    %v176 = vld [vmem:[%s5 + $0x60] sm:$0xff]
    %v177 = vld [vmem:[%s5 + $0x68] sm:$0xff]
    %v178 = vld [vmem:[%s5 + $0x70] sm:$0xff]
    %v179 = vld [vmem:[%s5 + $0x78] sm:$0xff]
    %v180 = vmax.f32 %v82, 0.0
    %v181 = vld [vmem:[#allocation2] sm:$0xff]
    %v182 = vld [vmem:[#allocation2 + $0x8] sm:$0xff]
    %v183 = vld [vmem:[#allocation2 + $0x10] sm:$0xff]
    %v184 = vld [vmem:[#allocation2 + $0x18] sm:$0xff]
    %v185 = vld [vmem:[#allocation2 + $0x20] sm:$0xff]
    %v186 = vld [vmem:[#allocation2 + $0x28] sm:$0xff]
    %v187 = vld [vmem:[#allocation2 + $0x30] sm:$0xff]
    %v188 = vld [vmem:[#allocation2 + $0x38] sm:$0xff]
    %v189 = vld [vmem:[#allocation2 + $0x40] sm:$0xff]
    %v190 = vld [vmem:[#allocation2 + $0x48] sm:$0xff]
    %v191 = vld [vmem:[#allocation2 + $0x50] sm:$0xff]
    %v192 = vld [vmem:[#allocation2 + $0x58] sm:$0xff]
    %v193 = vld [vmem:[#allocation2 + $0x60] sm:$0xff]
    %v194 = vld [vmem:[#allocation2 + $0x68] sm:$0xff]
    %v195 = vld [vmem:[#allocation2 + $0x70] sm:$0xff]
    %v196 = vld [vmem:[#allocation2 + $0x78] sm:$0xff]
    %v197 = vld [vmem:[%s4] sm:$0x1]
    %v199 = vperm.slane %v197, 0
    %201 = vmatpush.msra.mxu0 %v196
    %202 = vmatpush.msra.mxu0 %v195
    %203 = vmatpush.msra.mxu0 %v194
    %204 = vmatpush.msra.mxu0 %v193
    %205 = vmatpush.msra.mxu0 %v192
    %206 = vmatpush.msra.mxu0 %v191
    %207 = vmatpush.msra.mxu0 %v190
    %208 = vmatpush.msra.mxu0 %v189
    %209 = vmatpush.msra.mxu0 %v188
    %210 = vmatpush.msra.mxu0 %v187
    %211 = vmatpush.msra.mxu0 %v186
    %212 = vmatpush.msra.mxu0 %v185
    %213 = vmatpush.msra.mxu0 %v184
    %214 = vmatpush.msra.mxu0 %v183
    %215 = vmatpush.msra.mxu0 %v182
    %216 = vmatpush.msra.mxu0 %v181
    %217 = vmatmul.f32.gmra.mxu0 %v180
    %v218 = vpop.f32.mrf.mxu0
    %v219 = vadd.f32 %v199, %v218
    %220 = vdwg.mxu0
    %221 = vmatpush.msra.mxu0 %v179
    %222 = vmatpush.msra.mxu0 %v178
    %223 = vmatpush.msra.mxu0 %v177
    %224 = vmatpush.msra.mxu0 %v176
    %225 = vmatpush.msra.mxu0 %v175
    %226 = vmatpush.msra.mxu0 %v174
    %227 = vmatpush.msra.mxu0 %v173
    %228 = vmatpush.msra.mxu0 %v172
    %229 = vmatpush.msra.mxu0 %v171
    %230 = vmatpush.msra.mxu0 %v170
    %231 = vmatpush.msra.mxu0 %v169
    %232 = vmatpush.msra.mxu0 %v168
    %233 = vmatpush.msra.mxu0 %v167
    %234 = vmatpush.msra.mxu0 %v166
    %235 = vmatpush.msra.mxu0 %v165
    %236 = vmatpush.msra.mxu0 %v164
    %237 = vmatmul.f32.gmra.mxu0 %v219
    %v238 = vpop.f32.mrf.mxu0
    %v239 = vadd.f32 0.0, %v238
    %240 = vdwg.mxu0
    %v241 = vmax.f32 %v102, 0.0
    %s242 = scalar_lea.vmem [#allocation2], 128
    %v243 = vld [vmem:[%s242] sm:$0xff]
    %v244 = vld [vmem:[%s242 + $0x8] sm:$0xff]
    %v245 = vld [vmem:[%s242 + $0x10] sm:$0xff]
    %v246 = vld [vmem:[%s242 + $0x18] sm:$0xff]
    %v247 = vld [vmem:[%s242 + $0x20] sm:$0xff]
    %v248 = vld [vmem:[%s242 + $0x28] sm:$0xff]
    %v249 = vld [vmem:[%s242 + $0x30] sm:$0xff]
    %v250 = vld [vmem:[%s242 + $0x38] sm:$0xff]
    %v251 = vld [vmem:[%s242 + $0x40] sm:$0xff]
    %v252 = vld [vmem:[%s242 + $0x48] sm:$0xff]
    %v253 = vld [vmem:[%s242 + $0x50] sm:$0xff]
    %v254 = vld [vmem:[%s242 + $0x58] sm:$0xff]
    %v255 = vld [vmem:[%s242 + $0x60] sm:$0xff]
    %v256 = vld [vmem:[%s242 + $0x68] sm:$0xff]
    %v257 = vld [vmem:[%s242 + $0x70] sm:$0xff]
    %v258 = vld [vmem:[%s242 + $0x78] sm:$0xff]
    %s259 = scalar_lea.vmem %s4, 1
    %v260 = vld [vmem:[%s259] sm:$0x1]
    %v262 = vperm.slane %v260, 0
    %264 = vmatpush.msra.mxu0 %v258
    %265 = vmatpush.msra.mxu0 %v257
    %266 = vmatpush.msra.mxu0 %v256
    %267 = vmatpush.msra.mxu0 %v255
    %268 = vmatpush.msra.mxu0 %v254
    %269 = vmatpush.msra.mxu0 %v253
    %270 = vmatpush.msra.mxu0 %v252
    %271 = vmatpush.msra.mxu0 %v251
    %272 = vmatpush.msra.mxu0 %v250
    %273 = vmatpush.msra.mxu0 %v249
    %274 = vmatpush.msra.mxu0 %v248
    %275 = vmatpush.msra.mxu0 %v247
    %276 = vmatpush.msra.mxu0 %v246
    %277 = vmatpush.msra.mxu0 %v245
    %278 = vmatpush.msra.mxu0 %v244
    %279 = vmatpush.msra.mxu0 %v243
    %280 = vmatmul.f32.gmra.mxu0 %v241
    %v281 = vpop.f32.mrf.mxu0
    %v282 = vadd.f32 %v262, %v281
    %283 = vdwg.mxu0
    %284 = vmatpush.msra.mxu0 %v179
    %285 = vmatpush.msra.mxu0 %v178
    %286 = vmatpush.msra.mxu0 %v177
    %287 = vmatpush.msra.mxu0 %v176
    %288 = vmatpush.msra.mxu0 %v175
    %289 = vmatpush.msra.mxu0 %v174
    %290 = vmatpush.msra.mxu0 %v173
    %291 = vmatpush.msra.mxu0 %v172
    %292 = vmatpush.msra.mxu0 %v171
    %293 = vmatpush.msra.mxu0 %v170
    %294 = vmatpush.msra.mxu0 %v169
    %295 = vmatpush.msra.mxu0 %v168
    %296 = vmatpush.msra.mxu0 %v167
    %297 = vmatpush.msra.mxu0 %v166
    %298 = vmatpush.msra.mxu0 %v165
    %299 = vmatpush.msra.mxu0 %v164
    %300 = vmatmul.f32.gmra.mxu0 %v282
    %v301 = vpop.f32.mrf.mxu0
    %v302 = vadd.f32 0.0, %v301
    %303 = vdwg.mxu0
    %v304 = vmax.f32 %v122, 0.0
    %s305 = scalar_lea.vmem [#allocation2], 256
    %v306 = vld [vmem:[%s305] sm:$0xff]
    %v307 = vld [vmem:[%s305 + $0x8] sm:$0xff]
    %v308 = vld [vmem:[%s305 + $0x10] sm:$0xff]
    %v309 = vld [vmem:[%s305 + $0x18] sm:$0xff]
    %v310 = vld [vmem:[%s305 + $0x20] sm:$0xff]
    %v311 = vld [vmem:[%s305 + $0x28] sm:$0xff]
    %v312 = vld [vmem:[%s305 + $0x30] sm:$0xff]
    %v313 = vld [vmem:[%s305 + $0x38] sm:$0xff]
    %v314 = vld [vmem:[%s305 + $0x40] sm:$0xff]
    %v315 = vld [vmem:[%s305 + $0x48] sm:$0xff]
    %v316 = vld [vmem:[%s305 + $0x50] sm:$0xff]
    %v317 = vld [vmem:[%s305 + $0x58] sm:$0xff]
    %v318 = vld [vmem:[%s305 + $0x60] sm:$0xff]
    %v319 = vld [vmem:[%s305 + $0x68] sm:$0xff]
    %v320 = vld [vmem:[%s305 + $0x70] sm:$0xff]
    %v321 = vld [vmem:[%s305 + $0x78] sm:$0xff]
    %s322 = scalar_lea.vmem %s4, 2
    %v323 = vld [vmem:[%s322] sm:$0x1]
    %v325 = vperm.slane %v323, 0
    %327 = vmatpush.msra.mxu0 %v321
    %328 = vmatpush.msra.mxu0 %v320
    %329 = vmatpush.msra.mxu0 %v319
    %330 = vmatpush.msra.mxu0 %v318
    %331 = vmatpush.msra.mxu0 %v317
    %332 = vmatpush.msra.mxu0 %v316
    %333 = vmatpush.msra.mxu0 %v315
    %334 = vmatpush.msra.mxu0 %v314
    %335 = vmatpush.msra.mxu0 %v313
    %336 = vmatpush.msra.mxu0 %v312
    %337 = vmatpush.msra.mxu0 %v311
    %338 = vmatpush.msra.mxu0 %v310
    %339 = vmatpush.msra.mxu0 %v309
    %340 = vmatpush.msra.mxu0 %v308
    %341 = vmatpush.msra.mxu0 %v307
    %342 = vmatpush.msra.mxu0 %v306
    %343 = vmatmul.f32.gmra.mxu0 %v304
    %v344 = vpop.f32.mrf.mxu0
    %v345 = vadd.f32 %v325, %v344
    %346 = vdwg.mxu0
    %347 = vmatpush.msra.mxu0 %v179
    %348 = vmatpush.msra.mxu0 %v178
    %349 = vmatpush.msra.mxu0 %v177
    %350 = vmatpush.msra.mxu0 %v176
    %351 = vmatpush.msra.mxu0 %v175
    %352 = vmatpush.msra.mxu0 %v174
    %353 = vmatpush.msra.mxu0 %v173
    %354 = vmatpush.msra.mxu0 %v172
    %355 = vmatpush.msra.mxu0 %v171
    %356 = vmatpush.msra.mxu0 %v170
    %357 = vmatpush.msra.mxu0 %v169
    %358 = vmatpush.msra.mxu0 %v168
    %359 = vmatpush.msra.mxu0 %v167
    %360 = vmatpush.msra.mxu0 %v166
    %361 = vmatpush.msra.mxu0 %v165
    %362 = vmatpush.msra.mxu0 %v164
    %363 = vmatmul.f32.gmra.mxu0 %v345
    %v364 = vpop.f32.mrf.mxu0
    %v365 = vadd.f32 0.0, %v364
    %366 = vdwg.mxu0
    %v367 = vmax.f32 %v142, 0.0
    %s368 = scalar_lea.vmem [#allocation2], 384
    %v369 = vld [vmem:[%s368] sm:$0xff]
    %v370 = vld [vmem:[%s368 + $0x8] sm:$0xff]
    %v371 = vld [vmem:[%s368 + $0x10] sm:$0xff]
    %v372 = vld [vmem:[%s368 + $0x18] sm:$0xff]
    %v373 = vld [vmem:[%s368 + $0x20] sm:$0xff]
    %v374 = vld [vmem:[%s368 + $0x28] sm:$0xff]
    %v375 = vld [vmem:[%s368 + $0x30] sm:$0xff]
    %v376 = vld [vmem:[%s368 + $0x38] sm:$0xff]
    %v377 = vld [vmem:[%s368 + $0x40] sm:$0xff]
    %v378 = vld [vmem:[%s368 + $0x48] sm:$0xff]
    %v379 = vld [vmem:[%s368 + $0x50] sm:$0xff]
    %v380 = vld [vmem:[%s368 + $0x58] sm:$0xff]
    %v381 = vld [vmem:[%s368 + $0x60] sm:$0xff]
    %v382 = vld [vmem:[%s368 + $0x68] sm:$0xff]
    %v383 = vld [vmem:[%s368 + $0x70] sm:$0xff]
    %v384 = vld [vmem:[%s368 + $0x78] sm:$0xff]
    %s385 = scalar_lea.vmem %s4, 3
    %v386 = vld [vmem:[%s385] sm:$0x1]
    %v388 = vperm.slane %v386, 0
    %390 = vmatpush.msra.mxu0 %v384
    %391 = vmatpush.msra.mxu0 %v383
    %392 = vmatpush.msra.mxu0 %v382
    %393 = vmatpush.msra.mxu0 %v381
    %394 = vmatpush.msra.mxu0 %v380
    %395 = vmatpush.msra.mxu0 %v379
    %396 = vmatpush.msra.mxu0 %v378
    %397 = vmatpush.msra.mxu0 %v377
    %398 = vmatpush.msra.mxu0 %v376
    %399 = vmatpush.msra.mxu0 %v375
    %400 = vmatpush.msra.mxu0 %v374
    %401 = vmatpush.msra.mxu0 %v373
    %402 = vmatpush.msra.mxu0 %v372
    %403 = vmatpush.msra.mxu0 %v371
    %404 = vmatpush.msra.mxu0 %v370
    %405 = vmatpush.msra.mxu0 %v369
    %406 = vmatmul.f32.gmra.mxu0 %v367
    %v407 = vpop.f32.mrf.mxu0
    %v408 = vadd.f32 %v388, %v407
    %409 = vdwg.mxu0
    %410 = vmatpush.msra.mxu0 %v179
    %411 = vmatpush.msra.mxu0 %v178
    %412 = vmatpush.msra.mxu0 %v177
    %413 = vmatpush.msra.mxu0 %v176
    %414 = vmatpush.msra.mxu0 %v175
    %415 = vmatpush.msra.mxu0 %v174
    %416 = vmatpush.msra.mxu0 %v173
    %417 = vmatpush.msra.mxu0 %v172
    %418 = vmatpush.msra.mxu0 %v171
    %419 = vmatpush.msra.mxu0 %v170
    %420 = vmatpush.msra.mxu0 %v169
    %421 = vmatpush.msra.mxu0 %v168
    %422 = vmatpush.msra.mxu0 %v167
    %423 = vmatpush.msra.mxu0 %v166
    %424 = vmatpush.msra.mxu0 %v165
    %425 = vmatpush.msra.mxu0 %v164
    %426 = vmatmul.f32.gmra.mxu0 %v408
    %v427 = vpop.f32.mrf.mxu0
    %v428 = vadd.f32 0.0, %v427
    %429 = vdwg.mxu0
    %v430 = vlaneseq
    %v431 = vand.u32 %v430, 127
    %vm432 = vcmask 31744
    %v433 = vsel %vm432, %v162, -inf
    %434 = vmax.xlane.f32.xlu0 %v433
    %v435 = vpop.xlane.xlu0 %434
    %v436 = vsub.f32 %v162, %v435
    %v437 = vmul.f32 %v436, 1.442695
    %v438 = vpow.pop %v437
    %v439 = vsel %vm432, %v438, 0.0
    %440 = vadd.xlane.f32.xlu0 %v439
    %v441 = vpop.xlane.xlu0 %440
    %v442 = vrcp.pop %v441
    %v443 = vmul.f32 %v438, %v442
    %445 = vset.pattern.permute.xlu0 0
    %446 = vperm.xlu0 %445, %v443
    %v447 = vpop.permute.xlu0 %446
    %v449 = vmul.f32 %v447, %v239
    %450 = vset.pattern.permute.xlu0 1
    %451 = vperm.xlu0 %450, %v443
    %v452 = vpop.permute.xlu0 %451
    %v454 = vmul.f32 %v452, %v302
    %v455 = vadd.f32 %v449, %v454
    %456 = vset.pattern.permute.xlu0 2
    %457 = vperm.xlu0 %456, %v443
    %v458 = vpop.permute.xlu0 %457
    %v460 = vmul.f32 %v458, %v365
    %v461 = vadd.f32 %v455, %v460
    %462 = vset.pattern.permute.xlu0 3
    %463 = vperm.xlu0 %462, %v443
    %v464 = vpop.permute.xlu0 %463
    %v466 = vmul.f32 %v464, %v428
    %v467 = vadd.f32 %v461, %v466
    %vm468 = vcmp.eq.s32.totalorder %v431, 0
    %v469 = vsel %vm468, 1, 0
    %vm470 = vcmp.eq.s32.totalorder %v469, 1
    %v471 = vsel %vm470, %v467, 0.0
    %v472 = vadd.f32 %v471, 0.0
    %vm473 = vcmask 64544
    %v474 = vsel %vm473, %v162, -inf
    %475 = vmax.xlane.f32.xlu0 %v474
    %v476 = vpop.xlane.xlu0 %475
    %v477 = vsub.f32 %v162, %v476
    %v478 = vmul.f32 %v477, 1.442695
    %v479 = vpow.pop %v478
    %481 = vrot.lane.b32.xlu0 %v479, 124
    %v482 = vpop.permute.xlu0 %481
    %v484 = vsel %vm432, %v482, 0.0
    %485 = vadd.xlane.f32.xlu0 %v484
    %v486 = vpop.xlane.xlu0 %485
    %v487 = vrcp.pop %v486
    %v488 = vmul.f32 %v479, %v487
    %490 = vset.pattern.permute.xlu0 4
    %491 = vperm.xlu0 %490, %v488
    %v492 = vpop.permute.xlu0 %491
    %v494 = vmul.f32 %v492, %v239
    %495 = vset.pattern.permute.xlu0 5
    %496 = vperm.xlu0 %495, %v488
    %v497 = vpop.permute.xlu0 %496
    %v499 = vmul.f32 %v497, %v302
    %v500 = vadd.f32 %v494, %v499
    %501 = vset.pattern.permute.xlu0 6
    %502 = vperm.xlu0 %501, %v488
    %v503 = vpop.permute.xlu0 %502
    %v505 = vmul.f32 %v503, %v365
    %v506 = vadd.f32 %v500, %v505
    %507 = vset.pattern.permute.xlu0 7
    %508 = vperm.xlu0 %507, %v488
    %v509 = vpop.permute.xlu0 %508
    %v511 = vmul.f32 %v509, %v428
    %v512 = vadd.f32 %v506, %v511
    %vm513 = vcmp.eq.s32.totalorder %v431, 1
    %v514 = vsel %vm513, 1, 0
    %vm515 = vcmp.eq.s32.totalorder %v514, 1
    %v516 = vsel %vm515, %v512, 0.0
    %v517 = vadd.f32 %v472, %v516
    %vm518 = vcmask 97344
    %v519 = vsel %vm518, %v162, -inf
    %520 = vmax.xlane.f32.xlu0 %v519
    %v521 = vpop.xlane.xlu0 %520
    %v522 = vsub.f32 %v162, %v521
    %v523 = vmul.f32 %v522, 1.442695
    %v524 = vpow.pop %v523
    %526 = vrot.lane.b32.xlu0 %v524, 120
    %v527 = vpop.permute.xlu0 %526
    %v529 = vsel %vm432, %v527, 0.0
    %530 = vadd.xlane.f32.xlu0 %v529
    %v531 = vpop.xlane.xlu0 %530
    %v532 = vrcp.pop %v531
    %v533 = vmul.f32 %v524, %v532
    %535 = vset.pattern.permute.xlu0 8
    %536 = vperm.xlu0 %535, %v533
    %v537 = vpop.permute.xlu0 %536
    %v539 = vmul.f32 %v537, %v239
    %540 = vset.pattern.permute.xlu0 9
    %541 = vperm.xlu0 %540, %v533
    %v542 = vpop.permute.xlu0 %541
    %v544 = vmul.f32 %v542, %v302
    %v545 = vadd.f32 %v539, %v544
    %546 = vset.pattern.permute.xlu0 10
    %547 = vperm.xlu0 %546, %v533
    %v548 = vpop.permute.xlu0 %547
    %v550 = vmul.f32 %v548, %v365
    %v551 = vadd.f32 %v545, %v550
    %552 = vset.pattern.permute.xlu0 11
    %553 = vperm.xlu0 %552, %v533
    %v554 = vpop.permute.xlu0 %553
    %v556 = vmul.f32 %v554, %v428
    %v557 = vadd.f32 %v551, %v556
    %vm558 = vcmp.eq.s32.totalorder %v431, 2
    %v559 = vsel %vm558, 1, 0
    %vm560 = vcmp.eq.s32.totalorder %v559, 1
    %v561 = vsel %vm560, %v557, 0.0
    %v562 = vadd.f32 %v517, %v561
    %vm563 = vcmask 130144
    %v564 = vsel %vm563, %v162, -inf
    %565 = vmax.xlane.f32.xlu0 %v564
    %v566 = vpop.xlane.xlu0 %565
    %v567 = vsub.f32 %v162, %v566
    %v568 = vmul.f32 %v567, 1.442695
    %v569 = vpow.pop %v568
    %571 = vrot.lane.b32.xlu0 %v569, 116
    %v572 = vpop.permute.xlu0 %571
    %v574 = vsel %vm432, %v572, 0.0
    %575 = vadd.xlane.f32.xlu0 %v574
    %v576 = vpop.xlane.xlu0 %575
    %v577 = vrcp.pop %v576
    %v578 = vmul.f32 %v569, %v577
    %580 = vset.pattern.permute.xlu0 12
    %581 = vperm.xlu0 %580, %v578
    %v582 = vpop.permute.xlu0 %581
    %v584 = vmul.f32 %v582, %v239
    %585 = vset.pattern.permute.xlu0 13
    %586 = vperm.xlu0 %585, %v578
    %v587 = vpop.permute.xlu0 %586
    %v589 = vmul.f32 %v587, %v302
    %v590 = vadd.f32 %v584, %v589
    %591 = vset.pattern.permute.xlu0 14
    %592 = vperm.xlu0 %591, %v578
    %v593 = vpop.permute.xlu0 %592
    %v595 = vmul.f32 %v593, %v365
    %v596 = vadd.f32 %v590, %v595
    %597 = vset.pattern.permute.xlu0 15
    %598 = vperm.xlu0 %597, %v578
    %v599 = vpop.permute.xlu0 %598
    %v601 = vmul.f32 %v599, %v428
    %v602 = vadd.f32 %v596, %v601
    %vm603 = vcmp.eq.s32.totalorder %v431, 3
    %v604 = vsel %vm603, 1, 0
    %vm605 = vcmp.eq.s32.totalorder %v604, 1
    %v606 = vsel %vm605, %v602, 0.0
    %v607 = vadd.f32 %v562, %v606
    %v608 = vld [vmem:[%s6] sm:$0x1]
    %v610 = vperm.slane %v608, 0
    %v612 = vadd.f32 %v607, %v610
    %613 = vst.msk [vmem:[%s7] sm:$0xff] %vm432, %v612
    // Predicated region
    $region34: #{tpu_custom_call.1} parent=1 // pred_check
      _
    $region35: #{tpu_custom_call.1} parent=1 // pred_check_branch
      %615 = sbr.rel (0) target = $region37
    $region36: #{tpu_custom_call.1} parent=1 // pred_region
      _
    $region37: #{tpu_custom_call.1} parent=1 // pred_fallthru
      _
    // Predicated region
    $region38: #{tpu_custom_call.1} parent=1 // pred_check
      _
    $region39: #{tpu_custom_call.1} parent=1 // pred_check_branch
      %617 = sbr.rel (0) target = $region41
    $region40: #{tpu_custom_call.1} parent=1 // pred_region
      _
    $region41: #{tpu_custom_call.1} parent=1 // pred_fallthru
      _
    %618 = vsyncpa [#allocation3], 1

</llo_original>
